<compile_context>
chip_gen: v6e
topology: v6e:2x2x1
jax: 0.10.0
libtpu: 0.0.40
codegen_flags: <defaults>
</compile_context>

<pallas_src>
import jax
import jax.numpy as jnp
from jax import lax
from jax.experimental import pallas as pl
from jax.experimental.pallas import tpu as pltpu


def _round_up(x, m):
    return ((x + m - 1) // m) * m


def _make_f_linear_kernel(n_layers, in_dim, matmul_dtype):
    """Fused MLP: [dot -> +bias -> relu]*(L-1) -> dot -> +bias -> tanh.

    All layers read from a single stacked weight slab (L, U, U) and bias slab
    (L, 1, U); layer i is recovered with a static leading-axis index (no copy).
    """

    def kernel(z_ref, w_ref, b_ref, o_ref):
        z = z_ref[...].astype(jnp.float32)          # (TM, in_dim)
        for i in range(n_layers):                   # static unroll, L is compile-time
            w = w_ref[i]                            # (U, U), already matmul_dtype
            if i == 0:
                # First layer contracts over the un-padded input width; taking the
                # leading `in_dim` sublanes of the slab is a layout-preserving slice.
                w = w[:in_dim, :]
            acc = lax.dot_general(
                z.astype(matmul_dtype), w,
                dimension_numbers=(((1,), (0,)), ((), ())),   # canonical (M,K)@(K,N)
                preferred_element_type=jnp.float32,
            )
            acc = acc + b_ref[i]                    # (1, U) f32 row broadcast
            if i < n_layers - 1:
                z = jnp.maximum(acc, 0.0)           # VPU relu, f32
            else:
                z = jnp.tanh(acc)                   # EUP tanh, f32
        o_ref[...] = z.astype(o_ref.dtype)

    return kernel


def prepare_f_linear_params(params, *, input_dim, hidden_channels,
                            matmul_dtype=jnp.float32):
    """One-time parameter fusion (do this once; constant-folds under jit).

    params: torch nn.Linear layout (out_features, in_features):
      'w_in' (hh, hc), 'b_in' (hh,), 'ws_h' [(hh, hh)...], 'bs_h' [(hh,)...],
      'w_out' (input_dim*hc, hh), 'b_out' (input_dim*hc,)
    Returns a dict with the stacked, pre-transposed, zero-padded slabs.
    """
    w_in, b_in = params["w_in"], params["b_in"]
    ws_h, bs_h = params["ws_h"], params["bs_h"]
    w_out, b_out = params["w_out"], params["b_out"]

    hc = hidden_channels
    hh = w_in.shape[0]
    d_out = w_out.shape[0]
    assert w_in.shape == (hh, hc)
    assert d_out == input_dim * hidden_channels

    layers = [(w_in, b_in)] + list(zip(ws_h, bs_h)) + [(w_out, b_out)]
    L = len(layers)
    U = _round_up(max(hc, hh, d_out), 128)          # lane-dense uniform width

    w_slab, b_slab = [], []
    for w, b in layers:
        wt = jnp.asarray(w).T                       # (in, out) — pre-transposed once
        wt = jnp.pad(wt, ((0, U - wt.shape[0]), (0, U - wt.shape[1])))
        w_slab.append(wt)
        bb = jnp.asarray(b).reshape(1, -1)
        b_slab.append(jnp.pad(bb, ((0, 0), (0, U - bb.shape[1]))))

    return {
        "w_all": jnp.stack(w_slab).astype(matmul_dtype),   # (L, U, U)
        "b_all": jnp.stack(b_slab).astype(jnp.float32),    # (L, 1, U)
        "meta": dict(L=L, hc=hc, hh=hh, d_out=d_out, U=U,
                     input_dim=input_dim, hidden_channels=hidden_channels,
                     matmul_dtype=matmul_dtype),
    }


def f_linear_pallas(z, prepared, *, tile_m=256):
    """Forward pass of f_linear.

    z:        (..., hidden_channels)
    prepared: output of prepare_f_linear_params
    returns   (..., hidden_channels, input_dim)
    """
    meta = prepared["meta"]
    hc, d_out, U, L = meta["hc"], meta["d_out"], meta["U"], meta["L"]
    input_dim, hidden_channels = meta["input_dim"], meta["hidden_channels"]

    *lead, c = z.shape
    assert c == hc
    M = 1
    for d in lead:
        M *= d
    z_flat = z.reshape(M, hc)

    # Row tiling: small M -> a single full block; large M -> parallel row grid
    # (uses both TensorCores on v7x; no effect on v5e/v6e).
    TM = min(tile_m, _round_up(M, 8))
    Mp = _round_up(M, TM)
    if Mp != M:
        z_flat = jnp.pad(z_flat, ((0, Mp - M), (0, 0)))
    grid = (Mp // TM,)

    kernel = _make_f_linear_kernel(L, hc, meta["matmul_dtype"])

    out = pl.pallas_call(
        kernel,
        out_shape=jax.ShapeDtypeStruct((Mp, U), z.dtype),
        grid=grid,
        in_specs=[
            pl.BlockSpec((TM, hc), lambda i: (i, 0)),        # activations, row-tiled
            pl.BlockSpec((L, U, U), lambda i: (0, 0, 0)),    # weights: constant block,
            pl.BlockSpec((L, 1, U), lambda i: (0, 0, 0)),    #   VMEM-resident across tiles
        ],
        out_specs=pl.BlockSpec((TM, U), lambda i: (i, 0)),   # lane-dense (U mult of 128)
        compiler_params=pltpu.CompilerParams(
            dimension_semantics=("parallel",)),
    )(z_flat, prepared["w_all"], prepared["b_all"])

    out = out[:M, :d_out]
    # torch: .view(*z.shape[:-1], hidden_channels, input_dim) — free reshape.
    return out.reshape(*lead, hidden_channels, input_dim)


if __name__ == "__main__":
    # Config consistent with the module:
    #   input_dim=4, hidden_channels=32, hidden_hidden_channels=32,
    #   num_hidden_layers=2 (-> one linear in the ModuleList)
    input_dim = 4
    hidden_channels = 32
    hidden_hidden = 32
    num_hidden_layers = 2
    B, N = 2, 8

    key = jax.random.PRNGKey(0)
    keys = jax.random.split(key, 8)

    def torch_like_init(kw, kb, out_f, in_f):
        bound = 1.0 / (in_f ** 0.5)
        w = jax.random.uniform(kw, (out_f, in_f), jnp.float32, -bound, bound)
        b = jax.random.uniform(kb, (out_f,), jnp.float32, -bound, bound)
        return w, b

    z = jax.random.normal(keys[0], (B, N, hidden_channels), dtype=jnp.float32)

    w_in, b_in = torch_like_init(keys[1], keys[2], hidden_hidden, hidden_channels)
    w_h1, b_h1 = torch_like_init(keys[3], keys[4], hidden_hidden, hidden_hidden)
    w_out, b_out = torch_like_init(
        keys[5], keys[6], input_dim * hidden_channels, hidden_hidden)

    params = {"w_in": w_in, "b_in": b_in,
              "ws_h": [w_h1], "bs_h": [b_h1],
              "w_out": w_out, "b_out": b_out}

    def reference(zz):
        r = jnp.maximum(zz @ w_in.T + b_in, 0.0)
        r = jnp.maximum(r @ w_h1.T + b_h1, 0.0)
        r = (r @ w_out.T + b_out).reshape(*zz.shape[:-1], hidden_channels, input_dim)
        return jnp.tanh(r)

    # --- f32 MXU operands ---------------------------------------------------
    prep_f32 = prepare_f_linear_params(
        params, input_dim=input_dim, hidden_channels=hidden_channels,
        matmul_dtype=jnp.float32)
    out = f_linear_pallas(z, prep_f32)
    jax.block_until_ready(out)
    ref = reference(z)
    assert out.shape == (B, N, hidden_channels, input_dim)
    assert jnp.allclose(out, ref, atol=1e-3), float(jnp.max(jnp.abs(out - ref)))

    # --- bf16 MXU operands (native MXU dtype on v5e/v6e/v7x) -----------------
    prep_bf16 = prepare_f_linear_params(
        params, input_dim=input_dim, hidden_channels=hidden_channels,
        matmul_dtype=jnp.bfloat16)
    out_bf16 = f_linear_pallas(z, prep_bf16)
    jax.block_until_ready(out_bf16)
    assert jnp.allclose(out_bf16, ref, atol=5e-2), \
        float(jnp.max(jnp.abs(out_bf16 - ref)))

    # --- larger batch exercises the row-tiled parallel grid path -------------
    z_big = jax.random.normal(keys[7], (4, 100, hidden_channels), dtype=jnp.float32)
    out_big = f_linear_pallas(z_big, prep_f32, tile_m=256)
    jax.block_until_ready(out_big)
    ref_big = reference(z_big)
    assert out_big.shape == (4, 100, hidden_channels, input_dim)
    assert jnp.allclose(out_big, ref_big, atol=1e-3), \
        float(jnp.max(jnp.abs(out_big - ref_big)))

    print("KERNEL_OK")
</pallas_src>

<mosaic_0001>
module attributes {stable_mosaic.version = 11 : i64} {
  func.func @kernel(%arg0: i32, %arg1: memref<16x32xf32, #tpu.memory_space<vmem>>, %arg2: memref<3x128x128xf32, #tpu.memory_space<vmem>>, %arg3: memref<3x1x128xf32, #tpu.memory_space<vmem>>, %arg4: memref<16x128xf32, #tpu.memory_space<vmem>>) attributes {dimension_semantics = [#tpu.dimension_semantics<parallel>], iteration_bounds = array<i64: 1>, scalar_prefetch = 0 : i64, scratch_operands = 0 : i64, tpu.core_type = #tpu.core_type<tc>, window_params = [{transform_indices = @transform_0, window_bounds = array<i64: 16, 32>}, {pipeline_mode = #tpu.pipeline_mode<synchronous>, transform_indices = @transform_1, window_bounds = array<i64: 3, 128, 128>}, {pipeline_mode = #tpu.pipeline_mode<synchronous>, transform_indices = @transform_2, window_bounds = array<i64: 3, 1, 128>}, {transform_indices = @transform_3, window_bounds = array<i64: 16, 128>}]} {
    %c0 = arith.constant 0 : index
    %c0_0 = arith.constant 0 : index
    %0 = vector.load %arg1[%c0, %c0_0] : memref<16x32xf32, #tpu.memory_space<vmem>>, vector<16x32xf32>
    %c0_1 = arith.constant 0 : index
    %c0_2 = arith.constant 0 : index
    %c0_3 = arith.constant 0 : index
    %1 = vector.load %arg2[%c0_1, %c0_2, %c0_3] : memref<3x128x128xf32, #tpu.memory_space<vmem>>, vector<1x128x128xf32>
    %2 = vector.shape_cast %1 : vector<1x128x128xf32> to vector<128x128xf32>
    %3 = vector.extract_strided_slice %2 {offsets = [0, 0], sizes = [32, 128], strides = [1, 1]} : vector<128x128xf32> to vector<32x128xf32>
    %cst = arith.constant dense<0.000000e+00> : vector<16x128xf32>
    %4 = tpu.matmul %0, %3, %cst {dimension_numbers = #tpu.dot_dimension_numbers<[1], [0], [0], [1], [0, 0, 1, 1], [], []>} : vector<16x32xf32>, vector<32x128xf32>, vector<16x128xf32> -> vector<16x128xf32>
    %c0_4 = arith.constant 0 : index
    %c0_5 = arith.constant 0 : index
    %c0_6 = arith.constant 0 : index
    %5 = vector.load %arg3[%c0_4, %c0_5, %c0_6] : memref<3x1x128xf32, #tpu.memory_space<vmem>>, vector<1x1x128xf32>
    %6 = vector.shape_cast %5 : vector<1x1x128xf32> to vector<1x128xf32>
    %7 = vector.broadcast %6 : vector<1x128xf32> to vector<16x128xf32>
    %8 = arith.addf %4, %7 : vector<16x128xf32>
    %cst_7 = arith.constant 0.000000e+00 : f32
    %9 = vector.broadcast %cst_7 : f32 to vector<16x128xf32>
    %10 = arith.maximumf %8, %9 : vector<16x128xf32>
    %c1 = arith.constant 1 : index
    %c0_8 = arith.constant 0 : index
    %c0_9 = arith.constant 0 : index
    %11 = vector.load %arg2[%c1, %c0_8, %c0_9] : memref<3x128x128xf32, #tpu.memory_space<vmem>>, vector<1x128x128xf32>
    %12 = vector.shape_cast %11 : vector<1x128x128xf32> to vector<128x128xf32>
    %cst_10 = arith.constant dense<0.000000e+00> : vector<16x128xf32>
    %13 = tpu.matmul %10, %12, %cst_10 {dimension_numbers = #tpu.dot_dimension_numbers<[1], [0], [0], [1], [0, 0, 1, 1], [], []>} : vector<16x128xf32>, vector<128x128xf32>, vector<16x128xf32> -> vector<16x128xf32>
    %c1_11 = arith.constant 1 : index
    %c0_12 = arith.constant 0 : index
    %c0_13 = arith.constant 0 : index
    %14 = vector.load %arg3[%c1_11, %c0_12, %c0_13] : memref<3x1x128xf32, #tpu.memory_space<vmem>>, vector<1x1x128xf32>
    %15 = vector.shape_cast %14 : vector<1x1x128xf32> to vector<1x128xf32>
    %16 = vector.broadcast %15 : vector<1x128xf32> to vector<16x128xf32>
    %17 = arith.addf %13, %16 : vector<16x128xf32>
    %cst_14 = arith.constant 0.000000e+00 : f32
    %18 = vector.broadcast %cst_14 : f32 to vector<16x128xf32>
    %19 = arith.maximumf %17, %18 : vector<16x128xf32>
    %c2 = arith.constant 2 : index
    %c0_15 = arith.constant 0 : index
    %c0_16 = arith.constant 0 : index
    %20 = vector.load %arg2[%c2, %c0_15, %c0_16] : memref<3x128x128xf32, #tpu.memory_space<vmem>>, vector<1x128x128xf32>
    %21 = vector.shape_cast %20 : vector<1x128x128xf32> to vector<128x128xf32>
    %cst_17 = arith.constant dense<0.000000e+00> : vector<16x128xf32>
    %22 = tpu.matmul %19, %21, %cst_17 {dimension_numbers = #tpu.dot_dimension_numbers<[1], [0], [0], [1], [0, 0, 1, 1], [], []>} : vector<16x128xf32>, vector<128x128xf32>, vector<16x128xf32> -> vector<16x128xf32>
    %c2_18 = arith.constant 2 : index
    %c0_19 = arith.constant 0 : index
    %c0_20 = arith.constant 0 : index
    %23 = vector.load %arg3[%c2_18, %c0_19, %c0_20] : memref<3x1x128xf32, #tpu.memory_space<vmem>>, vector<1x1x128xf32>
    %24 = vector.shape_cast %23 : vector<1x1x128xf32> to vector<1x128xf32>
    %25 = vector.broadcast %24 : vector<1x128xf32> to vector<16x128xf32>
    %26 = arith.addf %22, %25 : vector<16x128xf32>
    %27 = math.tanh %26 : vector<16x128xf32>
    %c0_21 = arith.constant 0 : index
    %c0_22 = arith.constant 0 : index
    %28 = vector.load %arg4[%c0_21, %c0_22] : memref<16x128xf32, #tpu.memory_space<vmem>>, vector<16x128xf32>
    tpu.vector_store %arg4[%c0_21, %c0_22], %27 {strides = array<i32>} : memref<16x128xf32, #tpu.memory_space<vmem>>, vector<16x128xf32>,
    return
  }
  func.func @transform_0(%arg0: i32) -> (i32, i32) {
    %c0_i32 = arith.constant 0 : i32
    %c0_i32_0 = arith.constant 0 : i32
    return %arg0, %c0_i32 : i32, i32
  }
  func.func @transform_1(%arg0: i32) -> (i32, i32, i32) {
    %c0_i32 = arith.constant 0 : i32
    %c0_i32_0 = arith.constant 0 : i32
    %c0_i32_1 = arith.constant 0 : i32
    %c0_i32_2 = arith.constant 0 : i32
    return %c0_i32, %c0_i32_0, %c0_i32_1 : i32, i32, i32
  }
  func.func @transform_2(%arg0: i32) -> (i32, i32, i32) {
    %c0_i32 = arith.constant 0 : i32
    %c0_i32_0 = arith.constant 0 : i32
    %c0_i32_1 = arith.constant 0 : i32
    %c0_i32_2 = arith.constant 0 : i32
    return %c0_i32, %c0_i32_0, %c0_i32_1 : i32, i32, i32
  }
  func.func @transform_3(%arg0: i32) -> (i32, i32) {
    %c0_i32 = arith.constant 0 : i32
    %c0_i32_0 = arith.constant 0 : i32
    return %arg0, %c0_i32 : i32, i32
  }
}

</mosaic_0001>

<llo_original>
// kernel: tpu_custom_call.1
$region0: #{tpu_custom_call.1}
  #allocation0 [shape = 'u32[]', space=smem, size = 0x4, offset = 0x4, fixed_abs, tag = 'smem constant byte address 0x4 - core index']
  #allocation1 [shape = 'u32[144,128]{1,0:T(1,128)}', space=vmem, size = 0x12000, scoped, tag = 'internal scratch']
  %s0 = inlined_call_operand.hbm [shape: f32[16,32], index: 0, kind: input, shape index: {}]
  %s1 = inlined_call_operand.hbm [shape: f32[3,128,128], index: 1, kind: input, shape index: {}]
  %s2 = inlined_call_operand.vmem [shape: f32[3,1,128], index: 2, kind: input, shape index: {}]
  %s3 = inlined_call_operand.hbm [shape: f32[16,128], index: 3, kind: output, shape index: {}]
  %s4 = sld [smem:[#allocation0]]
  $region30: #{tpu_custom_call.1} parent=0
    _
  %s6 = ssub.s32 1, %s4
  %s7 = scalar_select 0, %s6, %s4
  $region1: #{tpu_custom_call.1} parent=0
    #allocation2 [shape = 'u8[8192]{0}', space=vmem, size = 0x2000, scoped, tag = 'input window, operand 0, single buffered']
    #allocation3 [shape = 's32[1]{0}', space=sflag, size = 0x4, scoped, tag = 'scoped memory for tpu_custom_call.1']
    #allocation4 [shape = 's32[1]{0}', space=sflag, size = 0x4, scoped, tag = 'scoped memory for tpu_custom_call.1']
    #allocation5 [shape = 'u8[196608]{0}', space=vmem, size = 0x30000, scoped, tag = 'input window, operand 1, single buffered']
    #allocation6 [shape = 's32[1]{0}', space=sflag, size = 0x4, scoped, tag = 'scoped memory for tpu_custom_call.1']
    #allocation7 [shape = 'u8[8192]{0}', space=vmem, size = 0x2000, scoped, tag = 'output window, operand 0, single buffered']
    %8 = vsyncpa [#allocation3], 0
    %9 = vsyncpa [#allocation6], 0
    %10 = vsyncpa [#allocation4], 0
    // Predicated region
    $region2: #{tpu_custom_call.1} parent=1 // pred_check
      _
    $region3: #{tpu_custom_call.1} parent=1 // pred_check_branch
      %12 = sbr.rel (0) target = $region5
    $region4: #{tpu_custom_call.1} parent=1 // pred_region
      %s14 = ssub.s32 256, 256
      %15 = vsyncadd [#allocation3], %s14
      %s16 = sshll.u32 [#allocation2], 4
      %s17 = int_to_ptr.vmem [resolvable:$true] %s16
      %22 = dma.hbm_to_vmem [thread:$0]  %s0, 256, %s17, [#allocation3], 128, 128, 8
    $region5: #{tpu_custom_call.1} parent=1 // pred_fallthru
      _
    // Predicated region
    $region6: #{tpu_custom_call.1} parent=1 // pred_check
      _
    $region7: #{tpu_custom_call.1} parent=1 // pred_check_branch
      %24 = sbr.rel (0) target = $region9
    $region8: #{tpu_custom_call.1} parent=1 // pred_region
      %s26 = ssub.s32 6144, 6144
      %27 = vsyncadd [#allocation6], %s26
      %s28 = sshll.u32 [#allocation5], 4
      %s29 = int_to_ptr.vmem [resolvable:$true] %s28
      %34 = dma.hbm_to_vmem [thread:$0]  %s1, 6144, %s29, [#allocation6], 128, 128, 8
    $region9: #{tpu_custom_call.1} parent=1 // pred_fallthru
      _
    // Predicated region
    $region10: #{tpu_custom_call.1} parent=1 // pred_check
      _
    $region11: #{tpu_custom_call.1} parent=1 // pred_check_branch
      %36 = sbr.rel (0) target = $region13
    $region12: #{tpu_custom_call.1} parent=1 // pred_region
      _
    $region13: #{tpu_custom_call.1} parent=1 // pred_fallthru
      _
    // Predicated region
    $region14: #{tpu_custom_call.1} parent=1 // pred_check
      _
    $region15: #{tpu_custom_call.1} parent=1 // pred_check_branch
      %38 = sbr.rel (0) target = $region17
    $region16: #{tpu_custom_call.1} parent=1 // pred_region
      %39 = dma.done [#allocation3], 256
    $region17: #{tpu_custom_call.1} parent=1 // pred_fallthru
      _
    // Predicated region
    $region18: #{tpu_custom_call.1} parent=1 // pred_check
      _
    $region19: #{tpu_custom_call.1} parent=1 // pred_check_branch
      %41 = sbr.rel (0) target = $region21
    $region20: #{tpu_custom_call.1} parent=1 // pred_region
      %42 = dma.done [#allocation6], 6144
    $region21: #{tpu_custom_call.1} parent=1 // pred_fallthru
      _
    %v43 = vld [vmem:[#allocation2] sm:$0xff]
    %v44 = vld [vmem:[#allocation2 + $0x8] sm:$0xff]
    %v45 = vld [vmem:[#allocation5] sm:$0xff]
    %v46 = vld [vmem:[#allocation5 + $0x8] sm:$0xff]
    %v47 = vld [vmem:[#allocation5 + $0x10] sm:$0xff]
    %v48 = vld [vmem:[#allocation5 + $0x18] sm:$0xff]
    %v49 = vld [vmem:[%s2] sm:$0x1]
    %v51 = vlaneseq
    %v52 = vshrl.u32 %v51, 7
    %v53 = vsub.s32 0, %v52
    %v54 = vrot.slane %v49, %v53
    %vm56 = vcmask 261120
    %v58 = vsel %vm56, %v43, 0
    %v61 = vsel %vm56, %v44, 0
    %63 = vmatprep.subr.mxu0 0.0
    %64 = vmatpush1.msra.mxu0 0.0
    %65 = vmatprep.subr.mxu0 0.0
    %66 = vmatpush1.msra.mxu0 0.0
    %67 = vmatprep.subr.mxu0 0.0
    %68 = vmatpush1.msra.mxu0 0.0
    %69 = vmatprep.subr.mxu0 0.0
    %70 = vmatpush1.msra.mxu0 0.0
    %71 = vmatprep.subr.mxu0 0.0
    %72 = vmatpush1.msra.mxu0 0.0
    %73 = vmatprep.subr.mxu0 0.0
    %74 = vmatpush1.msra.mxu0 0.0
    %75 = vmatprep.subr.mxu0 0.0
    %76 = vmatpush1.msra.mxu0 0.0
    %77 = vmatprep.subr.mxu0 0.0
    %78 = vmatpush1.msra.mxu0 0.0
    %79 = vmatprep.subr.mxu0 0.0
    %80 = vmatpush1.msra.mxu0 0.0
    %81 = vmatprep.subr.mxu0 0.0
    %82 = vmatpush1.msra.mxu0 0.0
    %83 = vmatprep.subr.mxu0 0.0
    %84 = vmatpush1.msra.mxu0 0.0
    %85 = vmatprep.subr.mxu0 0.0
    %86 = vmatpush1.msra.mxu0 0.0
    %87 = vmatprep.subr.mxu0 0.0
    %88 = vmatpush1.msra.mxu0 %v48
    %89 = vmatprep.subr.mxu0 0.0
    %90 = vmatpush1.msra.mxu0 %v47
    %91 = vmatprep.subr.mxu0 0.0
    %92 = vmatpush1.msra.mxu0 %v46
    %93 = vmatprep.subr.mxu0 0.0
    %94 = vmatpush1.msra.mxu0 %v45
    %95 = vmatprep.subr.mxu0 0.0
    %96 = vmatpush2.msra.mxu0 0.0
    %97 = vmatprep.subr.mxu0 0.0
    %98 = vmatpush2.msra.mxu0 0.0
    %99 = vmatprep.subr.mxu0 0.0
    %100 = vmatpush2.msra.mxu0 0.0
    %101 = vmatprep.subr.mxu0 0.0
    %102 = vmatpush2.msra.mxu0 0.0
    %103 = vmatprep.subr.mxu0 0.0
    %104 = vmatpush2.msra.mxu0 0.0
    %105 = vmatprep.subr.mxu0 0.0
    %106 = vmatpush2.msra.mxu0 0.0
    %107 = vmatprep.subr.mxu0 0.0
    %108 = vmatpush2.msra.mxu0 0.0
    %109 = vmatprep.subr.mxu0 0.0
    %110 = vmatpush2.msra.mxu0 0.0
    %111 = vmatprep.subr.mxu0 0.0
    %112 = vmatpush2.msra.mxu0 0.0
    %113 = vmatprep.subr.mxu0 0.0
    %114 = vmatpush2.msra.mxu0 0.0
    %115 = vmatprep.subr.mxu0 0.0
    %116 = vmatpush2.msra.mxu0 0.0
    %117 = vmatprep.subr.mxu0 0.0
    %118 = vmatpush2.msra.mxu0 0.0
    %119 = vmatprep.subr.mxu0 0.0
    %120 = vmatpush2.msra.mxu0 0.0
    %121 = vmatprep.subr.mxu0 0.0
    %122 = vmatpush2.msra.mxu0 0.0
    %123 = vmatprep.subr.mxu0 0.0
    %124 = vmatpush2.msra.mxu0 0.0
    %125 = vmatprep.subr.mxu0 0.0
    %126 = vmatpush2.msra.mxu0 0.0
    %127 = vmatprep.mubr.f32.mxu0 0.0
    %128 = vmatmul.mubr.f32.gmra.mxu0 %v58
    %v129 = vpop.f32.mrf.mxu0
    %v130 = vadd.f32 %v54, %v129
    %v131 = vpop.f32.mrf.mxu0
    %132 = vmatprep.mubr.f32.mxu0 0.0
    %133 = vmatmul.mubr.f32.gmra.mxu0 %v61
    %v134 = vpop.f32.mrf.mxu0
    %v135 = vadd.f32 %v54, %v134
    %v136 = vpop.f32.mrf.mxu0
    %137 = vdwg.mxu0
    %v138 = vmax.f32 %v130, 0.0
    %v139 = vmax.f32 %v135, 0.0
    %s140 = scalar_lea.vmem [#allocation5], 128
    %v141 = vld [vmem:[%s140] sm:$0xff]
    %v142 = vld [vmem:[%s140 + $0x8] sm:$0xff]
    %v143 = vld [vmem:[%s140 + $0x10] sm:$0xff]
    %v144 = vld [vmem:[%s140 + $0x18] sm:$0xff]
    %v145 = vld [vmem:[%s140 + $0x20] sm:$0xff]
    %v146 = vld [vmem:[%s140 + $0x28] sm:$0xff]
    %v147 = vld [vmem:[%s140 + $0x30] sm:$0xff]
    %v148 = vld [vmem:[%s140 + $0x38] sm:$0xff]
    %v149 = vld [vmem:[%s140 + $0x40] sm:$0xff]
    %v150 = vld [vmem:[%s140 + $0x48] sm:$0xff]
    %v151 = vld [vmem:[%s140 + $0x50] sm:$0xff]
    %v152 = vld [vmem:[%s140 + $0x58] sm:$0xff]
    %v153 = vld [vmem:[%s140 + $0x60] sm:$0xff]
    %v154 = vld [vmem:[%s140 + $0x68] sm:$0xff]
    %v155 = vld [vmem:[%s140 + $0x70] sm:$0xff]
    %v156 = vld [vmem:[%s140 + $0x78] sm:$0xff]
    %s157 = scalar_lea.vmem %s2, 1
    %v158 = vld [vmem:[%s157] sm:$0x1]
    %v160 = vlaneseq
    %v161 = vshrl.u32 %v160, 7
    %v162 = vsub.s32 0, %v161
    %v163 = vrot.slane %v158, %v162
    %165 = vmatprep.subr.mxu0 0.0
    %166 = vmatpush1.msra.mxu0 %v156
    %167 = vmatprep.subr.mxu0 0.0
    %168 = vmatpush1.msra.mxu0 %v155
    %169 = vmatprep.subr.mxu0 0.0
    %170 = vmatpush1.msra.mxu0 %v154
    %171 = vmatprep.subr.mxu0 0.0
    %172 = vmatpush1.msra.mxu0 %v153
    %173 = vmatprep.subr.mxu0 0.0
    %174 = vmatpush1.msra.mxu0 %v152
    %175 = vmatprep.subr.mxu0 0.0
    %176 = vmatpush1.msra.mxu0 %v151
    %177 = vmatprep.subr.mxu0 0.0
    %178 = vmatpush1.msra.mxu0 %v150
    %179 = vmatprep.subr.mxu0 0.0
    %180 = vmatpush1.msra.mxu0 %v149
    %181 = vmatprep.subr.mxu0 0.0
    %182 = vmatpush1.msra.mxu0 %v148
    %183 = vmatprep.subr.mxu0 0.0
    %184 = vmatpush1.msra.mxu0 %v147
    %185 = vmatprep.subr.mxu0 0.0
    %186 = vmatpush1.msra.mxu0 %v146
    %187 = vmatprep.subr.mxu0 0.0
    %188 = vmatpush1.msra.mxu0 %v145
    %189 = vmatprep.subr.mxu0 0.0
    %190 = vmatpush1.msra.mxu0 %v144
    %191 = vmatprep.subr.mxu0 0.0
    %192 = vmatpush1.msra.mxu0 %v143
    %193 = vmatprep.subr.mxu0 0.0
    %194 = vmatpush1.msra.mxu0 %v142
    %195 = vmatprep.subr.mxu0 0.0
    %196 = vmatpush1.msra.mxu0 %v141
    %197 = vmatprep.subr.mxu0 0.0
    %198 = vmatpush2.msra.mxu0 0.0
    %199 = vmatprep.subr.mxu0 0.0
    %200 = vmatpush2.msra.mxu0 0.0
    %201 = vmatprep.subr.mxu0 0.0
    %202 = vmatpush2.msra.mxu0 0.0
    %203 = vmatprep.subr.mxu0 0.0
    %204 = vmatpush2.msra.mxu0 0.0
    %205 = vmatprep.subr.mxu0 0.0
    %206 = vmatpush2.msra.mxu0 0.0
    %207 = vmatprep.subr.mxu0 0.0
    %208 = vmatpush2.msra.mxu0 0.0
    %209 = vmatprep.subr.mxu0 0.0
    %210 = vmatpush2.msra.mxu0 0.0
    %211 = vmatprep.subr.mxu0 0.0
    %212 = vmatpush2.msra.mxu0 0.0
    %213 = vmatprep.subr.mxu0 0.0
    %214 = vmatpush2.msra.mxu0 0.0
    %215 = vmatprep.subr.mxu0 0.0
    %216 = vmatpush2.msra.mxu0 0.0
    %217 = vmatprep.subr.mxu0 0.0
    %218 = vmatpush2.msra.mxu0 0.0
    %219 = vmatprep.subr.mxu0 0.0
    %220 = vmatpush2.msra.mxu0 0.0
    %221 = vmatprep.subr.mxu0 0.0
    %222 = vmatpush2.msra.mxu0 0.0
    %223 = vmatprep.subr.mxu0 0.0
    %224 = vmatpush2.msra.mxu0 0.0
    %225 = vmatprep.subr.mxu0 0.0
    %226 = vmatpush2.msra.mxu0 0.0
    %227 = vmatprep.subr.mxu0 0.0
    %228 = vmatpush2.msra.mxu0 0.0
    %229 = vmatprep.mubr.f32.mxu0 0.0
    %230 = vmatmul.mubr.f32.gmra.mxu0 %v138
    %v231 = vpop.f32.mrf.mxu0
    %v232 = vadd.f32 %v163, %v231
    %v233 = vpop.f32.mrf.mxu0
    %234 = vmatprep.mubr.f32.mxu0 0.0
    %235 = vmatmul.mubr.f32.gmra.mxu0 %v139
    %v236 = vpop.f32.mrf.mxu0
    %v237 = vadd.f32 %v163, %v236
    %v238 = vpop.f32.mrf.mxu0
    %239 = vdwg.mxu0
    %v240 = vmax.f32 %v232, 0.0
    %v241 = vmax.f32 %v237, 0.0
    %s242 = scalar_lea.vmem [#allocation5], 256
    %v243 = vld [vmem:[%s242] sm:$0xff]
    %v244 = vld [vmem:[%s242 + $0x8] sm:$0xff]
    %v245 = vld [vmem:[%s242 + $0x10] sm:$0xff]
    %v246 = vld [vmem:[%s242 + $0x18] sm:$0xff]
    %v247 = vld [vmem:[%s242 + $0x20] sm:$0xff]
    %v248 = vld [vmem:[%s242 + $0x28] sm:$0xff]
    %v249 = vld [vmem:[%s242 + $0x30] sm:$0xff]
    %v250 = vld [vmem:[%s242 + $0x38] sm:$0xff]
    %v251 = vld [vmem:[%s242 + $0x40] sm:$0xff]
    %v252 = vld [vmem:[%s242 + $0x48] sm:$0xff]
    %v253 = vld [vmem:[%s242 + $0x50] sm:$0xff]
    %v254 = vld [vmem:[%s242 + $0x58] sm:$0xff]
    %v255 = vld [vmem:[%s242 + $0x60] sm:$0xff]
    %v256 = vld [vmem:[%s242 + $0x68] sm:$0xff]
    %v257 = vld [vmem:[%s242 + $0x70] sm:$0xff]
    %v258 = vld [vmem:[%s242 + $0x78] sm:$0xff]
    %s259 = scalar_lea.vmem %s2, 2
    %v260 = vld [vmem:[%s259] sm:$0x1]
    %v262 = vlaneseq
    %v263 = vshrl.u32 %v262, 7
    %v264 = vsub.s32 0, %v263
    %v265 = vrot.slane %v260, %v264
    %267 = vmatprep.subr.mxu0 0.0
    %268 = vmatpush1.msra.mxu0 %v258
    %269 = vmatprep.subr.mxu0 0.0
    %270 = vmatpush1.msra.mxu0 %v257
    %271 = vmatprep.subr.mxu0 0.0
    %272 = vmatpush1.msra.mxu0 %v256
    %273 = vmatprep.subr.mxu0 0.0
    %274 = vmatpush1.msra.mxu0 %v255
    %275 = vmatprep.subr.mxu0 0.0
    %276 = vmatpush1.msra.mxu0 %v254
    %277 = vmatprep.subr.mxu0 0.0
    %278 = vmatpush1.msra.mxu0 %v253
    %279 = vmatprep.subr.mxu0 0.0
    %280 = vmatpush1.msra.mxu0 %v252
    %281 = vmatprep.subr.mxu0 0.0
    %282 = vmatpush1.msra.mxu0 %v251
    %283 = vmatprep.subr.mxu0 0.0
    %284 = vmatpush1.msra.mxu0 %v250
    %285 = vmatprep.subr.mxu0 0.0
    %286 = vmatpush1.msra.mxu0 %v249
    %287 = vmatprep.subr.mxu0 0.0
    %288 = vmatpush1.msra.mxu0 %v248
    %289 = vmatprep.subr.mxu0 0.0
    %290 = vmatpush1.msra.mxu0 %v247
    %291 = vmatprep.subr.mxu0 0.0
    %292 = vmatpush1.msra.mxu0 %v246
    %293 = vmatprep.subr.mxu0 0.0
    %294 = vmatpush1.msra.mxu0 %v245
    %295 = vmatprep.subr.mxu0 0.0
    %296 = vmatpush1.msra.mxu0 %v244
    %297 = vmatprep.subr.mxu0 0.0
    %298 = vmatpush1.msra.mxu0 %v243
    %299 = vmatprep.subr.mxu0 0.0
    %300 = vmatpush2.msra.mxu0 0.0
    %301 = vmatprep.subr.mxu0 0.0
    %302 = vmatpush2.msra.mxu0 0.0
    %303 = vmatprep.subr.mxu0 0.0
    %304 = vmatpush2.msra.mxu0 0.0
    %305 = vmatprep.subr.mxu0 0.0
    %306 = vmatpush2.msra.mxu0 0.0
    %307 = vmatprep.subr.mxu0 0.0
    %308 = vmatpush2.msra.mxu0 0.0
    %309 = vmatprep.subr.mxu0 0.0
    %310 = vmatpush2.msra.mxu0 0.0
    %311 = vmatprep.subr.mxu0 0.0
    %312 = vmatpush2.msra.mxu0 0.0
    %313 = vmatprep.subr.mxu0 0.0
    %314 = vmatpush2.msra.mxu0 0.0
    %315 = vmatprep.subr.mxu0 0.0
    %316 = vmatpush2.msra.mxu0 0.0
    %317 = vmatprep.subr.mxu0 0.0
    %318 = vmatpush2.msra.mxu0 0.0
    %319 = vmatprep.subr.mxu0 0.0
    %320 = vmatpush2.msra.mxu0 0.0
    %321 = vmatprep.subr.mxu0 0.0
    %322 = vmatpush2.msra.mxu0 0.0
    %323 = vmatprep.subr.mxu0 0.0
    %324 = vmatpush2.msra.mxu0 0.0
    %325 = vmatprep.subr.mxu0 0.0
    %326 = vmatpush2.msra.mxu0 0.0
    %327 = vmatprep.subr.mxu0 0.0
    %328 = vmatpush2.msra.mxu0 0.0
    %329 = vmatprep.subr.mxu0 0.0
    %330 = vmatpush2.msra.mxu0 0.0
    %331 = vmatprep.mubr.f32.mxu0 0.0
    %332 = vmatmul.mubr.f32.gmra.mxu0 %v240
    %v333 = vpop.f32.mrf.mxu0
    %v334 = vadd.f32 %v265, %v333
    %v335 = vpop.f32.mrf.mxu0
    %336 = vmatprep.mubr.f32.mxu0 0.0
    %337 = vmatmul.mubr.f32.gmra.mxu0 %v241
    %v338 = vpop.f32.mrf.mxu0
    %v339 = vadd.f32 %v265, %v338
    %v340 = vpop.f32.mrf.mxu0
    %341 = vdwg.mxu0
    %v342 = vtanh.pop %v334
    %v343 = vtanh.pop %v339
    %344 = vst [vmem:[#allocation7] sm:$0xff] %v342
    %345 = vst [vmem:[#allocation7 + $0x8] sm:$0xff] %v343
    // Predicated region
    $region22: #{tpu_custom_call.1} parent=1 // pred_check
      _
    $region23: #{tpu_custom_call.1} parent=1 // pred_check_branch
      %347 = sbr.rel (0) target = $region25
    $region24: #{tpu_custom_call.1} parent=1 // pred_region
      %s349 = ssub.s32 256, 256
      %350 = vsyncadd [#allocation4], %s349
      %s351 = sshll.u32 [#allocation7], 4
      %s352 = int_to_ptr.vmem [resolvable:$true] %s351
      %357 = dma.vmem_to_hbm [thread:$0]  %s352, 256, %s3, [#allocation4], 128, 128, 8
    $region25: #{tpu_custom_call.1} parent=1 // pred_fallthru
      _
    // Predicated region
    $region26: #{tpu_custom_call.1} parent=1 // pred_check
      _
    $region27: #{tpu_custom_call.1} parent=1 // pred_check_branch
      %359 = sbr.rel (0) target = $region29
    $region28: #{tpu_custom_call.1} parent=1 // pred_region
      %360 = dma.done [#allocation4], 256
    $region29: #{tpu_custom_call.1} parent=1 // pred_fallthru
      _
    %361 = vsyncpa [#allocation3], 1
    %362 = vsyncpa [#allocation6], 1
    %363 = vsyncpa [#allocation4], 1

</llo_original>
